<compile_context>
chip_gen: v7x
topology: tpu7x:2x2x1
jax: 0.10.0
libtpu: 0.0.40
codegen_flags: <defaults>
</compile_context>

<pallas_src>
import functools

import jax
import jax.numpy as jnp
import numpy as np
from jax.experimental import pallas as pl
from jax.experimental.pallas import tpu as pltpu


def _spade_kernel(x_ref, fm_ref, w_ref, b_ref, mask_ref, o_ref, *, H, W):
    # x_ref:    (1, Cout, HW)      activation, spatial flattened on lanes
    # fm_ref:   (1, Cin,  HW)      feature map, spatial flattened on lanes
    # w_ref:    (9, 2*Cout, Cin)   fused [gamma|beta] conv weights per tap
    # b_ref:    (2*Cout, 1)        fused biases
    # mask_ref: (9, HW)            per-tap validity masks (conv zero padding)
    # o_ref:    (1, Cout, HW)
    HW = H * W
    Cout = o_ref.shape[1]

    fm = fm_ref[0].astype(jnp.float32)          # (Cin, HW)
    w_all = w_ref[...].astype(jnp.float32)      # (9, 2*Cout, Cin)
    masks = mask_ref[...]                       # (9, HW) f32

    acc = jnp.zeros((2 * Cout, HW), jnp.float32)

    # 3x3 conv: per tap -> lane roll (XLU) + mask (VPU) + one fused
    # (2*Cout, Cin) x (Cin, HW) matmul with the spatial axis lane-dense.
    tap = 0
    for kh in range(3):
        for kw in range(3):
            dh, dw = kh - 1, kw - 1
            s = dh * W + dw                     # flat source offset
            if s == 0:
                shifted = fm                    # center tap: no shift, no mask
            else:
                shifted = pltpu.roll(fm, shift=(-s) % HW, axis=1)
                shifted = shifted * masks[tap:tap + 1, :]
            acc += jnp.dot(w_all[tap], shifted,
                           preferred_element_type=jnp.float32)
            tap += 1

    gb = acc + b_ref[...].astype(jnp.float32)   # (2*Cout, HW)
    gamma = gb[:Cout, :]
    beta = gb[Cout:, :]

    x = x_ref[0].astype(jnp.float32)            # (Cout, HW)
    out = x * (1.0 + gamma) + beta
    o_ref[0] = out.astype(o_ref.dtype)


def apply_style_spade(x_nchw, fm_nchw, w_gamma, b_gamma, w_beta, b_beta):
    """x_nchw: (N, Cout, H, W); fm_nchw: (N, Cin, H, W).
    w_*: (Cout, Cin, 3, 3) PyTorch conv layout; b_*: (Cout,)."""
    N, Cout, H, W = x_nchw.shape
    Cin = fm_nchw.shape[1]
    HW = H * W

    # Free (metadata-only) reshapes: keep NCHW, flatten spatial onto lanes.
    x_flat = x_nchw.reshape(N, Cout, HW)
    fm_flat = fm_nchw.reshape(N, Cin, HW)

    # Fuse gamma/beta conv weights along the out-channel axis so one matmul
    # per tap produces both: (O, I, kh, kw) -> (tap, 2*Cout, Cin).
    w_cat = jnp.concatenate([w_gamma, w_beta], axis=0)          # (2*Cout,Cin,3,3)
    w_taps = jnp.transpose(w_cat, (2, 3, 0, 1)).reshape(9, 2 * Cout, Cin)
    b_cat = jnp.concatenate([b_gamma, b_beta], axis=0).reshape(2 * Cout, 1)
    b_cat = b_cat.astype(jnp.float32)

    # Per-tap validity masks (host-side, tiny): the flat roll wraps across the
    # image border; these zero the wrapped positions == conv zero padding.
    h_idx, w_idx = np.meshgrid(np.arange(H), np.arange(W), indexing="ij")
    masks_np = np.empty((9, HW), np.float32)
    t = 0
    for kh in range(3):
        for kw in range(3):
            dh, dw = kh - 1, kw - 1
            valid = ((h_idx + dh >= 0) & (h_idx + dh < H) &
                     (w_idx + dw >= 0) & (w_idx + dw < W))
            masks_np[t] = valid.reshape(-1).astype(np.float32)
            t += 1
    masks = jnp.asarray(masks_np)

    kernel = functools.partial(_spade_kernel, H=H, W=W)

    # Working-set based VMEM budget (double-buffered activation blocks).
    itemsize = jnp.dtype(x_nchw.dtype).itemsize
    block_bytes = 2 * (2 * Cout + Cin) * HW * itemsize
    const_bytes = (9 * 2 * Cout * Cin + 2 * Cout) * 4 + 9 * HW * 4
    vmem_limit = int(min(max(4 * (block_bytes + const_bytes), 32 * 2 ** 20),
                         64 * 2 ** 20))

    out = pl.pallas_call(
        kernel,
        out_shape=jax.ShapeDtypeStruct((N, Cout, HW), x_nchw.dtype),
        grid_spec=pltpu.PrefetchScalarGridSpec(
            num_scalar_prefetch=0,
            grid=(N,),
            in_specs=[
                pl.BlockSpec((1, Cout, HW), lambda n: (n, 0, 0)),
                pl.BlockSpec((1, Cin, HW), lambda n: (n, 0, 0)),
                pl.BlockSpec((9, 2 * Cout, Cin), lambda n: (0, 0, 0)),
                pl.BlockSpec((2 * Cout, 1), lambda n: (0, 0)),
                pl.BlockSpec((9, HW), lambda n: (0, 0)),
            ],
            out_specs=pl.BlockSpec((1, Cout, HW), lambda n: (n, 0, 0)),
        ),
        compiler_params=pltpu.CompilerParams(
            dimension_semantics=("parallel",),
            vmem_limit_bytes=vmem_limit),
    )(x_flat, fm_flat, w_taps, b_cat, masks)

    # Free reshape back to NCHW.
    return out.reshape(N, Cout, H, W)


def _reference(x_nchw, fm_nchw, w_gamma, b_gamma, w_beta, b_beta):
    """Pure-JAX reference (lax conv, NCHW)."""
    def conv(fm, w, b):
        y = jax.lax.conv_general_dilated(
            fm, w, window_strides=(1, 1), padding=((1, 1), (1, 1)),
            dimension_numbers=("NCHW", "OIHW", "NCHW"))
        return y + b.reshape(1, -1, 1, 1)

    gamma = conv(fm_nchw, w_gamma, b_gamma)
    beta = conv(fm_nchw, w_beta, b_beta)
    return x_nchw * (1.0 + gamma) + beta


if __name__ == "__main__":
    key = jax.random.PRNGKey(0)
    N, Cin, Cout, H, W = 2, 4, 4, 16, 16

    k1, k2, k3, k4, k5, k6 = jax.random.split(key, 6)
    x = jax.random.normal(k1, (N, Cout, H, W), jnp.float32)
    fm = jax.random.normal(k2, (N, Cin, H, W), jnp.float32)

    # Deterministic "Conv2d" parameter init (Kaiming-uniform-ish bounds).
    fan_in = Cin * 3 * 3
    bound = 1.0 / np.sqrt(fan_in)
    w_gamma = jax.random.uniform(k3, (Cout, Cin, 3, 3), jnp.float32,
                                 -bound, bound)
    b_gamma = jax.random.uniform(k4, (Cout,), jnp.float32, -bound, bound)
    w_beta = jax.random.uniform(k5, (Cout, Cin, 3, 3), jnp.float32,
                                -bound, bound)
    b_beta = jax.random.uniform(k6, (Cout,), jnp.float32, -bound, bound)

    out = apply_style_spade(x, fm, w_gamma, b_gamma, w_beta, b_beta)
    out = jax.block_until_ready(out)

    ref = _reference(x, fm, w_gamma, b_gamma, w_beta, b_beta)
    np.testing.assert_allclose(np.asarray(out), np.asarray(ref),
                               rtol=1e-4, atol=1e-4)

    print("KERNEL_OK")
</pallas_src>

<mosaic_0001>
module attributes {stable_mosaic.version = 11 : i64} {
  func.func @_spade_kernel(%arg0: i32, %arg1: memref<1x4x256xf32, #tpu.memory_space<vmem>>, %arg2: memref<1x4x256xf32, #tpu.memory_space<vmem>>, %arg3: memref<9x8x4xf32, #tpu.memory_space<vmem>>, %arg4: memref<8x1xf32, #tpu.memory_space<vmem>>, %arg5: memref<9x256xf32, #tpu.memory_space<vmem>>, %arg6: memref<1x4x256xf32, #tpu.memory_space<vmem>>) attributes {dimension_semantics = [#tpu.dimension_semantics<parallel>], iteration_bounds = array<i64: 2>, scalar_prefetch = 0 : i64, scratch_operands = 0 : i64, tpu.core_type = #tpu.core_type<tc>, window_params = [{transform_indices = @transform_0, window_bounds = array<i64: 1, 4, 256>}, {transform_indices = @transform_1, window_bounds = array<i64: 1, 4, 256>}, {pipeline_mode = #tpu.pipeline_mode<synchronous>, transform_indices = @transform_2, window_bounds = array<i64: 9, 8, 4>}, {pipeline_mode = #tpu.pipeline_mode<synchronous>, transform_indices = @transform_3, window_bounds = array<i64: 8, 1>}, {pipeline_mode = #tpu.pipeline_mode<synchronous>, transform_indices = @transform_4, window_bounds = array<i64: 9, 256>}, {transform_indices = @transform_5, window_bounds = array<i64: 1, 4, 256>}]} {
    %c0 = arith.constant 0 : index
    %c0_0 = arith.constant 0 : index
    %c0_1 = arith.constant 0 : index
    %0 = vector.load %arg2[%c0, %c0_0, %c0_1] : memref<1x4x256xf32, #tpu.memory_space<vmem>>, vector<1x4x256xf32>
    %1 = vector.shape_cast %0 : vector<1x4x256xf32> to vector<4x256xf32>
    %c0_2 = arith.constant 0 : index
    %c0_3 = arith.constant 0 : index
    %c0_4 = arith.constant 0 : index
    %2 = vector.load %arg3[%c0_2, %c0_3, %c0_4] : memref<9x8x4xf32, #tpu.memory_space<vmem>>, vector<9x8x4xf32>
    %c0_5 = arith.constant 0 : index
    %c0_6 = arith.constant 0 : index
    %3 = vector.load %arg5[%c0_5, %c0_6] : memref<9x256xf32, #tpu.memory_space<vmem>>, vector<9x256xf32>
    %cst = arith.constant 0.000000e+00 : f32
    %4 = vector.broadcast %cst : f32 to vector<8x256xf32>
    %c17_i32 = arith.constant 17 : i32
    %5 = tpu.dynamic_rotate %1 by %c17_i32 dim 1 : vector<4x256xf32>, i32 -> vector<4x256xf32>
    %6 = vector.extract_strided_slice %3 {offsets = [0, 0], sizes = [1, 256], strides = [1, 1]} : vector<9x256xf32> to vector<1x256xf32>
    %7 = vector.broadcast %6 : vector<1x256xf32> to vector<4x256xf32>
    %8 = arith.mulf %5, %7 : vector<4x256xf32>
    %9 = vector.extract_strided_slice %2 {offsets = [0, 0, 0], sizes = [1, 8, 4], strides = [1, 1, 1]} : vector<9x8x4xf32> to vector<1x8x4xf32>
    %10 = vector.shape_cast %9 : vector<1x8x4xf32> to vector<8x4xf32>
    %cst_7 = arith.constant dense<0.000000e+00> : vector<8x256xf32>
    %11 = tpu.matmul %10, %8, %cst_7 {dimension_numbers = #tpu.dot_dimension_numbers<[1], [0], [0], [1], [0, 0, 1, 1], [], []>} : vector<8x4xf32>, vector<4x256xf32>, vector<8x256xf32> -> vector<8x256xf32>
    %12 = arith.addf %4, %11 : vector<8x256xf32>
    %c16_i32 = arith.constant 16 : i32
    %13 = tpu.dynamic_rotate %1 by %c16_i32 dim 1 : vector<4x256xf32>, i32 -> vector<4x256xf32>
    %14 = vector.extract_strided_slice %3 {offsets = [1, 0], sizes = [1, 256], strides = [1, 1]} : vector<9x256xf32> to vector<1x256xf32>
    %15 = vector.broadcast %14 : vector<1x256xf32> to vector<4x256xf32>
    %16 = arith.mulf %13, %15 : vector<4x256xf32>
    %17 = vector.extract_strided_slice %2 {offsets = [1, 0, 0], sizes = [1, 8, 4], strides = [1, 1, 1]} : vector<9x8x4xf32> to vector<1x8x4xf32>
    %18 = vector.shape_cast %17 : vector<1x8x4xf32> to vector<8x4xf32>
    %cst_8 = arith.constant dense<0.000000e+00> : vector<8x256xf32>
    %19 = tpu.matmul %18, %16, %cst_8 {dimension_numbers = #tpu.dot_dimension_numbers<[1], [0], [0], [1], [0, 0, 1, 1], [], []>} : vector<8x4xf32>, vector<4x256xf32>, vector<8x256xf32> -> vector<8x256xf32>
    %20 = arith.addf %12, %19 : vector<8x256xf32>
    %c15_i32 = arith.constant 15 : i32
    %21 = tpu.dynamic_rotate %1 by %c15_i32 dim 1 : vector<4x256xf32>, i32 -> vector<4x256xf32>
    %22 = vector.extract_strided_slice %3 {offsets = [2, 0], sizes = [1, 256], strides = [1, 1]} : vector<9x256xf32> to vector<1x256xf32>
    %23 = vector.broadcast %22 : vector<1x256xf32> to vector<4x256xf32>
    %24 = arith.mulf %21, %23 : vector<4x256xf32>
    %25 = vector.extract_strided_slice %2 {offsets = [2, 0, 0], sizes = [1, 8, 4], strides = [1, 1, 1]} : vector<9x8x4xf32> to vector<1x8x4xf32>
    %26 = vector.shape_cast %25 : vector<1x8x4xf32> to vector<8x4xf32>
    %cst_9 = arith.constant dense<0.000000e+00> : vector<8x256xf32>
    %27 = tpu.matmul %26, %24, %cst_9 {dimension_numbers = #tpu.dot_dimension_numbers<[1], [0], [0], [1], [0, 0, 1, 1], [], []>} : vector<8x4xf32>, vector<4x256xf32>, vector<8x256xf32> -> vector<8x256xf32>
    %28 = arith.addf %20, %27 : vector<8x256xf32>
    %c1_i32 = arith.constant 1 : i32
    %29 = tpu.dynamic_rotate %1 by %c1_i32 dim 1 : vector<4x256xf32>, i32 -> vector<4x256xf32>
    %30 = vector.extract_strided_slice %3 {offsets = [3, 0], sizes = [1, 256], strides = [1, 1]} : vector<9x256xf32> to vector<1x256xf32>
    %31 = vector.broadcast %30 : vector<1x256xf32> to vector<4x256xf32>
    %32 = arith.mulf %29, %31 : vector<4x256xf32>
    %33 = vector.extract_strided_slice %2 {offsets = [3, 0, 0], sizes = [1, 8, 4], strides = [1, 1, 1]} : vector<9x8x4xf32> to vector<1x8x4xf32>
    %34 = vector.shape_cast %33 : vector<1x8x4xf32> to vector<8x4xf32>
    %cst_10 = arith.constant dense<0.000000e+00> : vector<8x256xf32>
    %35 = tpu.matmul %34, %32, %cst_10 {dimension_numbers = #tpu.dot_dimension_numbers<[1], [0], [0], [1], [0, 0, 1, 1], [], []>} : vector<8x4xf32>, vector<4x256xf32>, vector<8x256xf32> -> vector<8x256xf32>
    %36 = arith.addf %28, %35 : vector<8x256xf32>
    %37 = vector.extract_strided_slice %2 {offsets = [4, 0, 0], sizes = [1, 8, 4], strides = [1, 1, 1]} : vector<9x8x4xf32> to vector<1x8x4xf32>
    %38 = vector.shape_cast %37 : vector<1x8x4xf32> to vector<8x4xf32>
    %cst_11 = arith.constant dense<0.000000e+00> : vector<8x256xf32>
    %39 = tpu.matmul %38, %1, %cst_11 {dimension_numbers = #tpu.dot_dimension_numbers<[1], [0], [0], [1], [0, 0, 1, 1], [], []>} : vector<8x4xf32>, vector<4x256xf32>, vector<8x256xf32> -> vector<8x256xf32>
    %40 = arith.addf %36, %39 : vector<8x256xf32>
    %c255_i32 = arith.constant 255 : i32
    %41 = tpu.dynamic_rotate %1 by %c255_i32 dim 1 : vector<4x256xf32>, i32 -> vector<4x256xf32>
    %42 = vector.extract_strided_slice %3 {offsets = [5, 0], sizes = [1, 256], strides = [1, 1]} : vector<9x256xf32> to vector<1x256xf32>
    %43 = vector.broadcast %42 : vector<1x256xf32> to vector<4x256xf32>
    %44 = arith.mulf %41, %43 : vector<4x256xf32>
    %45 = vector.extract_strided_slice %2 {offsets = [5, 0, 0], sizes = [1, 8, 4], strides = [1, 1, 1]} : vector<9x8x4xf32> to vector<1x8x4xf32>
    %46 = vector.shape_cast %45 : vector<1x8x4xf32> to vector<8x4xf32>
    %cst_12 = arith.constant dense<0.000000e+00> : vector<8x256xf32>
    %47 = tpu.matmul %46, %44, %cst_12 {dimension_numbers = #tpu.dot_dimension_numbers<[1], [0], [0], [1], [0, 0, 1, 1], [], []>} : vector<8x4xf32>, vector<4x256xf32>, vector<8x256xf32> -> vector<8x256xf32>
    %48 = arith.addf %40, %47 : vector<8x256xf32>
    %c241_i32 = arith.constant 241 : i32
    %49 = tpu.dynamic_rotate %1 by %c241_i32 dim 1 : vector<4x256xf32>, i32 -> vector<4x256xf32>
    %50 = vector.extract_strided_slice %3 {offsets = [6, 0], sizes = [1, 256], strides = [1, 1]} : vector<9x256xf32> to vector<1x256xf32>
    %51 = vector.broadcast %50 : vector<1x256xf32> to vector<4x256xf32>
    %52 = arith.mulf %49, %51 : vector<4x256xf32>
    %53 = vector.extract_strided_slice %2 {offsets = [6, 0, 0], sizes = [1, 8, 4], strides = [1, 1, 1]} : vector<9x8x4xf32> to vector<1x8x4xf32>
    %54 = vector.shape_cast %53 : vector<1x8x4xf32> to vector<8x4xf32>
    %cst_13 = arith.constant dense<0.000000e+00> : vector<8x256xf32>
    %55 = tpu.matmul %54, %52, %cst_13 {dimension_numbers = #tpu.dot_dimension_numbers<[1], [0], [0], [1], [0, 0, 1, 1], [], []>} : vector<8x4xf32>, vector<4x256xf32>, vector<8x256xf32> -> vector<8x256xf32>
    %56 = arith.addf %48, %55 : vector<8x256xf32>
    %c240_i32 = arith.constant 240 : i32
    %57 = tpu.dynamic_rotate %1 by %c240_i32 dim 1 : vector<4x256xf32>, i32 -> vector<4x256xf32>
    %58 = vector.extract_strided_slice %3 {offsets = [7, 0], sizes = [1, 256], strides = [1, 1]} : vector<9x256xf32> to vector<1x256xf32>
    %59 = vector.broadcast %58 : vector<1x256xf32> to vector<4x256xf32>
    %60 = arith.mulf %57, %59 : vector<4x256xf32>
    %61 = vector.extract_strided_slice %2 {offsets = [7, 0, 0], sizes = [1, 8, 4], strides = [1, 1, 1]} : vector<9x8x4xf32> to vector<1x8x4xf32>
    %62 = vector.shape_cast %61 : vector<1x8x4xf32> to vector<8x4xf32>
    %cst_14 = arith.constant dense<0.000000e+00> : vector<8x256xf32>
    %63 = tpu.matmul %62, %60, %cst_14 {dimension_numbers = #tpu.dot_dimension_numbers<[1], [0], [0], [1], [0, 0, 1, 1], [], []>} : vector<8x4xf32>, vector<4x256xf32>, vector<8x256xf32> -> vector<8x256xf32>
    %64 = arith.addf %56, %63 : vector<8x256xf32>
    %c239_i32 = arith.constant 239 : i32
    %65 = tpu.dynamic_rotate %1 by %c239_i32 dim 1 : vector<4x256xf32>, i32 -> vector<4x256xf32>
    %66 = vector.extract_strided_slice %3 {offsets = [8, 0], sizes = [1, 256], strides = [1, 1]} : vector<9x256xf32> to vector<1x256xf32>
    %67 = vector.broadcast %66 : vector<1x256xf32> to vector<4x256xf32>
    %68 = arith.mulf %65, %67 : vector<4x256xf32>
    %69 = vector.extract_strided_slice %2 {offsets = [8, 0, 0], sizes = [1, 8, 4], strides = [1, 1, 1]} : vector<9x8x4xf32> to vector<1x8x4xf32>
    %70 = vector.shape_cast %69 : vector<1x8x4xf32> to vector<8x4xf32>
    %cst_15 = arith.constant dense<0.000000e+00> : vector<8x256xf32>
    %71 = tpu.matmul %70, %68, %cst_15 {dimension_numbers = #tpu.dot_dimension_numbers<[1], [0], [0], [1], [0, 0, 1, 1], [], []>} : vector<8x4xf32>, vector<4x256xf32>, vector<8x256xf32> -> vector<8x256xf32>
    %72 = arith.addf %64, %71 : vector<8x256xf32>
    %c0_16 = arith.constant 0 : index
    %c0_17 = arith.constant 0 : index
    %73 = vector.load %arg4[%c0_16, %c0_17] : memref<8x1xf32, #tpu.memory_space<vmem>>, vector<8x1xf32>
    %74 = vector.broadcast %73 : vector<8x1xf32> to vector<8x256xf32>
    %75 = arith.addf %72, %74 : vector<8x256xf32>
    %76 = vector.extract_strided_slice %75 {offsets = [0, 0], sizes = [4, 256], strides = [1, 1]} : vector<8x256xf32> to vector<4x256xf32>
    %77 = vector.extract_strided_slice %75 {offsets = [4, 0], sizes = [4, 256], strides = [1, 1]} : vector<8x256xf32> to vector<4x256xf32>
    %c0_18 = arith.constant 0 : index
    %c0_19 = arith.constant 0 : index
    %c0_20 = arith.constant 0 : index
    %78 = vector.load %arg1[%c0_18, %c0_19, %c0_20] : memref<1x4x256xf32, #tpu.memory_space<vmem>>, vector<1x4x256xf32>
    %79 = vector.shape_cast %78 : vector<1x4x256xf32> to vector<4x256xf32>
    %cst_21 = arith.constant 1.000000e+00 : f32
    %80 = vector.broadcast %cst_21 : f32 to vector<4x256xf32>
    %81 = arith.addf %80, %76 : vector<4x256xf32>
    %82 = arith.mulf %79, %81 : vector<4x256xf32>
    %83 = arith.addf %82, %77 : vector<4x256xf32>
    %c0_22 = arith.constant 0 : index
    %c0_23 = arith.constant 0 : index
    %c0_24 = arith.constant 0 : index
    %84 = vector.load %arg6[%c0_22, %c0_23, %c0_24] : memref<1x4x256xf32, #tpu.memory_space<vmem>>, vector<1x4x256xf32>
    %85 = vector.shape_cast %84 : vector<1x4x256xf32> to vector<4x256xf32>
    %86 = vector.shape_cast %83 : vector<4x256xf32> to vector<1x4x256xf32>
    tpu.vector_store %arg6[%c0_22, %c0_23, %c0_24], %86 {strides = array<i32>} : memref<1x4x256xf32, #tpu.memory_space<vmem>>, vector<1x4x256xf32>,
    return
  }
  func.func @transform_0(%arg0: i32) -> (i32, i32, i32) {
    %c0_i32 = arith.constant 0 : i32
    %c0_i32_0 = arith.constant 0 : i32
    %c0_i32_1 = arith.constant 0 : i32
    return %arg0, %c0_i32, %c0_i32_0 : i32, i32, i32
  }
  func.func @transform_1(%arg0: i32) -> (i32, i32, i32) {
    %c0_i32 = arith.constant 0 : i32
    %c0_i32_0 = arith.constant 0 : i32
    %c0_i32_1 = arith.constant 0 : i32
    return %arg0, %c0_i32, %c0_i32_0 : i32, i32, i32
  }
  func.func @transform_2(%arg0: i32) -> (i32, i32, i32) {
    %c0_i32 = arith.constant 0 : i32
    %c0_i32_0 = arith.constant 0 : i32
    %c0_i32_1 = arith.constant 0 : i32
    %c0_i32_2 = arith.constant 0 : i32
    return %c0_i32, %c0_i32_0, %c0_i32_1 : i32, i32, i32
  }
  func.func @transform_3(%arg0: i32) -> (i32, i32) {
    %c0_i32 = arith.constant 0 : i32
    %c0_i32_0 = arith.constant 0 : i32
    %c0_i32_1 = arith.constant 0 : i32
    return %c0_i32, %c0_i32_0 : i32, i32
  }
  func.func @transform_4(%arg0: i32) -> (i32, i32) {
    %c0_i32 = arith.constant 0 : i32
    %c0_i32_0 = arith.constant 0 : i32
    %c0_i32_1 = arith.constant 0 : i32
    return %c0_i32, %c0_i32_0 : i32, i32
  }
  func.func @transform_5(%arg0: i32) -> (i32, i32, i32) {
    %c0_i32 = arith.constant 0 : i32
    %c0_i32_0 = arith.constant 0 : i32
    %c0_i32_1 = arith.constant 0 : i32
    return %arg0, %c0_i32, %c0_i32_0 : i32, i32, i32
  }
}

</mosaic_0001>

<llo_original>
// kernel: tpu_custom_call.1
$region0: #{tpu_custom_call.1}
  #allocation0 [shape = 'u32[]', space=smem, size = 0x4, offset = 0x4, fixed_abs, tag = 'smem constant byte address 0x4 - core index']
  #allocation1 [shape = 'u32[144,128]{1,0:T(1,128)}', space=vmem, size = 0x12000, scoped, tag = 'internal scratch']
  %s0 = inlined_call_operand.vmem [shape: f32[2,4,256], index: 0, kind: input, shape index: {}]
  %s1 = inlined_call_operand.vmem [shape: f32[2,4,256], index: 1, kind: input, shape index: {}]
  %s2 = inlined_call_operand.vmem [shape: f32[9,8,4], index: 2, kind: input, shape index: {}]
  %s3 = inlined_call_operand.vmem [shape: f32[8,1], index: 3, kind: input, shape index: {}]
  %s4 = inlined_call_operand.vmem [shape: f32[9,256], index: 4, kind: input, shape index: {}]
  %s5 = inlined_call_operand.hbm [shape: f32[2,4,256], index: 5, kind: output, shape index: {}]
  %s6 = sld [smem:[#allocation0]]
  $region53: #{tpu_custom_call.1} parent=0
    _
  %s8 = ssub.s32 1, %s6
  %s9 = scalar_select 0, %s8, %s6
  $region1: #{tpu_custom_call.1} parent=0
    #allocation2 [shape = 'u8[8192]{0}', space=vmem, size = 0x2000, scoped, tag = 'output window, operand 0']
    #allocation3 [shape = 's32[2]{0}', space=sflag, size = 0x8, scoped, tag = 'scoped memory for tpu_custom_call.1']
    %10 = vsyncpa [#allocation3], 0
    %s11 = scalar_lea.sflag [#allocation3], 1
    %12 = vsyncpa %s11, 0
    loop: start=0, step=1, limit=4
    $region2: #{tpu_custom_call.1} parent=1 // loop_pre_header
      _
    $region3: #{tpu_custom_call.1} parent=1 // loop_header
      %s14 = sphi 0, %s18
      %p15 = scmp.ge.s32.totalorder %s14, 4
      %s24 = sphi 0, %s26
      %s27 = sphi 0, %s24
      %s28 = sphi 0, %s27
      %s44 = sphi 0, %s28
      %s50 = sphi 0, %s52
      %s53 = sphi 0, %s50
      %s54 = sphi 0, %s53
      %s70 = sphi 0, %s54
      %s74 = sphi 0, %s74
      %s76 = sphi 0, %s74
      %s77 = sphi 0, %s76
      %s91 = sphi 0, %s77
      %s95 = sphi 0, %s95
      %s97 = sphi 0, %s95
      %s98 = sphi 0, %s97
      %s112 = sphi 0, %s98
      %s116 = sphi 0, %s116
      %s118 = sphi 0, %s116
      %s119 = sphi 0, %s118
      %s133 = sphi 0, %s119
      %s139 = sphi 0, %s141
      %s142 = sphi 0, %s139
      %s143 = sphi 0, %s142
      %s159 = sphi 0, %s143
    $region4: #{tpu_custom_call.1} parent=1 // loop_header_branch
      %17 = sbr.rel (%p15) target = $region8
    $region5: #{tpu_custom_call.1} parent=1 // loop_body
      %s19 = ssub.s32 %s14, 1
      %s20 = ssub.s32 %s14, 2
      %s21 = sadd.s32 %s14, 1
      %s22 = ssub.s32 %s14, %s21
      %p23 = scmp.eq.s32.totalorder %s22, 0
      %s25 = sadd.s32 %s24, 1
      %s26 = scalar_select %p23, %s24, %s25
      %p29 = pneg %p23
      %p30 = scmp.eq.s32.totalorder %s14, 1
      %p31 = por %p29, %p30
      %p32 = scmp.ne.s32.totalorder %s24, %s27
      %p33 = scmp.eq.s32.totalorder %s14, 0
      %p34 = por %p32, %p33
      %p35 = scmp.ne.s32.totalorder %s24, %s27
      %p36 = scmp.eq.s32.totalorder %s19, 1
      %p37 = por %p35, %p36
      %p38 = scmp.ne.s32.totalorder %s27, %s28
      %p39 = scmp.eq.s32.totalorder %s19, 0
      %p40 = por %p38, %p39
      %p41 = scmp.ne.s32.totalorder %s27, %s28
      %p42 = scmp.eq.s32.totalorder %s20, 1
      %p43 = por %p41, %p42
      %p45 = scmp.ne.s32.totalorder %s28, %s44
      %p46 = scmp.eq.s32.totalorder %s20, 0
      %p47 = por %p45, %p46
      %s48 = ssub.s32 %s14, %s21
      %p49 = scmp.eq.s32.totalorder %s48, 0
      %s51 = sadd.s32 %s50, 1
      %s52 = scalar_select %p49, %s50, %s51
      %p55 = pneg %p49
      %p56 = scmp.eq.s32.totalorder %s14, 1
      %p57 = por %p55, %p56
      %p58 = scmp.ne.s32.totalorder %s50, %s53
      %p59 = scmp.eq.s32.totalorder %s14, 0
      %p60 = por %p58, %p59
      %p61 = scmp.ne.s32.totalorder %s50, %s53
      %p62 = scmp.eq.s32.totalorder %s19, 1
      %p63 = por %p61, %p62
      %p64 = scmp.ne.s32.totalorder %s53, %s54
      %p65 = scmp.eq.s32.totalorder %s19, 0
      %p66 = por %p64, %p65
      %p67 = scmp.ne.s32.totalorder %s53, %s54
      %p68 = scmp.eq.s32.totalorder %s20, 1
      %p69 = por %p67, %p68
      %p71 = scmp.ne.s32.totalorder %s54, %s70
      %p72 = scmp.eq.s32.totalorder %s20, 0
      %p73 = por %p71, %p72
      %s75 = sadd.s32 %s74, 1
      %p78 = scmp.eq.s32.totalorder %s14, 1
      %p79 = scmp.ne.s32.totalorder %s74, %s76
      %p80 = scmp.eq.s32.totalorder %s14, 0
      %p81 = por %p79, %p80
      %p82 = scmp.ne.s32.totalorder %s74, %s76
      %p83 = scmp.eq.s32.totalorder %s19, 1
      %p84 = por %p82, %p83
      %p85 = scmp.ne.s32.totalorder %s76, %s77
      %p86 = scmp.eq.s32.totalorder %s19, 0
      %p87 = por %p85, %p86
      %p88 = scmp.ne.s32.totalorder %s76, %s77
      %p89 = scmp.eq.s32.totalorder %s20, 1
      %p90 = por %p88, %p89
      %p92 = scmp.ne.s32.totalorder %s77, %s91
      %p93 = scmp.eq.s32.totalorder %s20, 0
      %p94 = por %p92, %p93
      %s96 = sadd.s32 %s95, 1
      %p99 = scmp.eq.s32.totalorder %s14, 1
      %p100 = scmp.ne.s32.totalorder %s95, %s97
      %p101 = scmp.eq.s32.totalorder %s14, 0
      %p102 = por %p100, %p101
      %p103 = scmp.ne.s32.totalorder %s95, %s97
      %p104 = scmp.eq.s32.totalorder %s19, 1
      %p105 = por %p103, %p104
      %p106 = scmp.ne.s32.totalorder %s97, %s98
      %p107 = scmp.eq.s32.totalorder %s19, 0
      %p108 = por %p106, %p107
      %p109 = scmp.ne.s32.totalorder %s97, %s98
      %p110 = scmp.eq.s32.totalorder %s20, 1
      %p111 = por %p109, %p110
      %p113 = scmp.ne.s32.totalorder %s98, %s112
      %p114 = scmp.eq.s32.totalorder %s20, 0
      %p115 = por %p113, %p114
      %s117 = sadd.s32 %s116, 1
      %p120 = scmp.eq.s32.totalorder %s14, 1
      %p121 = scmp.ne.s32.totalorder %s116, %s118
      %p122 = scmp.eq.s32.totalorder %s14, 0
      %p123 = por %p121, %p122
      %p124 = scmp.ne.s32.totalorder %s116, %s118
      %p125 = scmp.eq.s32.totalorder %s19, 1
      %p126 = por %p124, %p125
      %p127 = scmp.ne.s32.totalorder %s118, %s119
      %p128 = scmp.eq.s32.totalorder %s19, 0
      %p129 = por %p127, %p128
      %p130 = scmp.ne.s32.totalorder %s118, %s119
      %p131 = scmp.eq.s32.totalorder %s20, 1
      %p132 = por %p130, %p131
      %p134 = scmp.ne.s32.totalorder %s119, %s133
      %p135 = scmp.eq.s32.totalorder %s20, 0
      %p136 = por %p134, %p135
      %s137 = ssub.s32 %s14, %s21
      %p138 = scmp.eq.s32.totalorder %s137, 0
      %s140 = sadd.s32 %s139, 1
      %s141 = scalar_select %p138, %s139, %s140
      %p144 = pneg %p138
      %p145 = scmp.eq.s32.totalorder %s14, 1
      %p146 = por %p144, %p145
      %p147 = scmp.ne.s32.totalorder %s139, %s142
      %p148 = scmp.eq.s32.totalorder %s14, 0
      %p149 = por %p147, %p148
      %p150 = scmp.ne.s32.totalorder %s139, %s142
      %p151 = scmp.eq.s32.totalorder %s19, 1
      %p152 = por %p150, %p151
      %p153 = scmp.ne.s32.totalorder %s142, %s143
      %p154 = scmp.eq.s32.totalorder %s19, 0
      %p155 = por %p153, %p154
      %p156 = scmp.ne.s32.totalorder %s142, %s143
      %p157 = scmp.eq.s32.totalorder %s20, 1
      %p158 = por %p156, %p157
      %p160 = scmp.ne.s32.totalorder %s143, %s159
      %p161 = scmp.eq.s32.totalorder %s20, 0
      %p162 = por %p160, %p161
      %p163 = scmp.le.s32.totalorder 1, %s14
      %p164 = scmp.lt.s32.totalorder %s14, 3
      %p165 = pnand %p163, %p164
      %p166 = pneg %p165
      // Predicated region
      $region9: #{tpu_custom_call.1} parent=5 // pred_check
        _
      $region10: #{tpu_custom_call.1} parent=5 // pred_check_branch
        %168 = sbr.rel (%p165) target = $region12
      $region11: #{tpu_custom_call.1} parent=5 // pred_region
        %s169 = ssub.s32 %s14, 1
        // Predicated region
        $region13: #{tpu_custom_call.1} parent=11 // pred_check
          %p170 = pneg %p87
        $region14: #{tpu_custom_call.1} parent=11 // pred_check_branch
          %172 = sbr.rel (%p170) target = $region16
        $region15: #{tpu_custom_call.1} parent=11 // pred_region
          _
        $region16: #{tpu_custom_call.1} parent=11 // pred_fallthru
          _
        // Predicated region
        $region17: #{tpu_custom_call.1} parent=11 // pred_check
          %p173 = pneg %p108
        $region18: #{tpu_custom_call.1} parent=11 // pred_check_branch
          %175 = sbr.rel (%p173) target = $region20
        $region19: #{tpu_custom_call.1} parent=11 // pred_region
          _
        $region20: #{tpu_custom_call.1} parent=11 // pred_fallthru
          _
        // Predicated region
        $region21: #{tpu_custom_call.1} parent=11 // pred_check
          %p176 = pneg %p129
        $region22: #{tpu_custom_call.1} parent=11 // pred_check_branch
          %178 = sbr.rel (%p176) target = $region24
        $region23: #{tpu_custom_call.1} parent=11 // pred_region
          _
        $region24: #{tpu_custom_call.1} parent=11 // pred_fallthru
          _
      $region12: #{tpu_custom_call.1} parent=5 // pred_fallthru
        _
      %p179 = scmp.lt.s32.totalorder %s14, 2
      // Predicated region
      $region25: #{tpu_custom_call.1} parent=5 // pred_check
        %p180 = pneg %p179
      $region26: #{tpu_custom_call.1} parent=5 // pred_check_branch
        %182 = sbr.rel (%p180) target = $region28
      $region27: #{tpu_custom_call.1} parent=5 // pred_region
        // Predicated region
        $region29: #{tpu_custom_call.1} parent=27 // pred_check
          %p183 = pneg %p34
        $region30: #{tpu_custom_call.1} parent=27 // pred_check_branch
          %185 = sbr.rel (%p183) target = $region32
        $region31: #{tpu_custom_call.1} parent=27 // pred_region
          %p186 = scmp.lt.s32.totalorder %s14, 1
          %s187 = scalar_select %p186, %s14, 1
          %s188 = smul.addr %s187, 2
          %s189 = smul.addr %s188, 4
          %s190 = scalar_lea.vmem %s0, %s189
        $region32: #{tpu_custom_call.1} parent=27 // pred_fallthru
          _
        // Predicated region
        $region33: #{tpu_custom_call.1} parent=27 // pred_check
          %p191 = pneg %p60
        $region34: #{tpu_custom_call.1} parent=27 // pred_check_branch
          %193 = sbr.rel (%p191) target = $region36
        $region35: #{tpu_custom_call.1} parent=27 // pred_region
          %p194 = scmp.lt.s32.totalorder %s14, 1
          %s195 = scalar_select %p194, %s14, 1
          %s196 = smul.addr %s195, 2
          %s197 = smul.addr %s196, 4
          %s198 = scalar_lea.vmem %s1, %s197
        $region36: #{tpu_custom_call.1} parent=27 // pred_fallthru
          _
      $region28: #{tpu_custom_call.1} parent=5 // pred_fallthru
        _
      %p199 = scmp.le.s32.totalorder 1, %s14
      %p200 = scmp.lt.s32.totalorder %s14, 3
      %p201 = pnand %p199, %p200
      %p202 = pneg %p201
      // Predicated region
      $region37: #{tpu_custom_call.1} parent=5 // pred_check
        _
      $region38: #{tpu_custom_call.1} parent=5 // pred_check_branch
        %204 = sbr.rel (%p201) target = $region40
      $region39: #{tpu_custom_call.1} parent=5 // pred_region
        %s205 = ssub.s32 %s14, 1
        %p206 = scmp.lt.s32.totalorder %s19, 1
        %s207 = scalar_select %p206, %s19, 1
        %s208 = smul.addr %s207, 2
        %s209 = smul.addr %s208, 4
        %s210 = scalar_lea.vmem %s0, %s209
        %p211 = pneg %p40
        %p212 = pneg %p37
        %p213 = scmp.lt.s32.totalorder %s19, 1
        %s214 = scalar_select %p213, %s19, 1
        %s215 = smul.addr %s214, 2
        %s216 = smul.addr %s215, 4
        %s217 = scalar_lea.vmem %s1, %s216
        %p218 = pneg %p66
        %p219 = pneg %p63
        %p220 = pneg %p87
        %p221 = pneg %p84
        %p222 = pneg %p108
        %p223 = pneg %p105
        %p224 = pneg %p129
        %p225 = pneg %p126
        %p226 = pneg %p155
        %p227 = pneg %p152
        %s228 = sand.u32 %s142, 1
        %s229 = scalar_lea.sflag [#allocation3], %s228
        %s230 = sand.u32 %s142, 1
        %s231 = smul.addr %s230, 8
        %s232 = scalar_lea.vmem [#allocation2], %s231
        %p233 = scmp.lt.s32.totalorder %s19, 1
        %s234 = scalar_select %p233, %s19, 1
        %s235 = smul.addr %s234, 2
        %s236 = smul.addr %s235, 4
        %s237 = scalar_lea.vmem %s0, %s236
        %p238 = scmp.lt.s32.totalorder %s19, 1
        %s239 = scalar_select %p238, %s19, 1
        %s240 = smul.addr %s239, 2
        %s241 = smul.addr %s240, 4
        %s242 = scalar_lea.vmem %s1, %s241
        %v243 = vld [vmem:[%s242] sm:$0xff]
        %v244 = vld [vmem:[%s2] sm:$0xff]
        %v245 = vld [vmem:[%s2 + $0x8] sm:$0xff]
        %v246 = vld [vmem:[%s2 + $0x10] sm:$0xff]
        %v247 = vld [vmem:[%s2 + $0x18] sm:$0xff]
        %v248 = vld [vmem:[%s2 + $0x20] sm:$0xff]
        %v249 = vld [vmem:[%s2 + $0x28] sm:$0xff]
        %v250 = vld [vmem:[%s2 + $0x30] sm:$0xff]
        %v251 = vld [vmem:[%s2 + $0x38] sm:$0xff]
        %v252 = vld [vmem:[%s2 + $0x40] sm:$0xff]
        %v253 = vld [vmem:[%s4] sm:$0xff]
        %v254 = vld [vmem:[%s4 + $0x8] sm:$0xff]
        %v255 = vld [vmem:[%s4 + $0x10] sm:$0x1]
        %v256 = vld [vmem:[%s4 + $0x18] sm:$0x1]
        %v258 = vcombine.high %v243, %v243
        %260 = vrot.lane.b32.xlu0 %v243, 17
        %v261 = vpop.permute.xlu0 %260
        %262 = vrot.lane.b32.xlu0 %v258, 17
        %v263 = vpop.permute.xlu0 %262
        %v264 = vlaneseq
        %v265 = vand.u32 %v264, 127
        %vm266 = vcmp.lt.s32.totalorder %v265, 17
        %v267 = vsel %vm266, %v261, %v263
        %v268 = vsel %vm266, %v263, %v261
        %v269 = vlaneseq
        %v270 = vshrl.u32 %v269, 7
        %v271 = vsub.s32 0, %v270
        %v272 = vrot.slane %v253, %v271
        %v273 = vlaneseq
        %v274 = vshrl.u32 %v273, 7
        %v275 = vsub.s32 0, %v274
        %v276 = vrot.slane %v254, %v275
        %v277 = vmul.f32 %v268, %v272
        %v278 = vmul.f32 %v267, %v276
        %279 = vrot.lane.b32.xlu0 %v243, 16
        %v280 = vpop.permute.xlu0 %279
        %281 = vrot.lane.b32.xlu0 %v258, 16
        %v282 = vpop.permute.xlu0 %281
        %vm283 = vcmp.lt.s32.totalorder %v265, 16
        %v284 = vsel %vm283, %v280, %v282
        %v285 = vsel %vm283, %v282, %v280
        %v286 = vlaneseq
        %v287 = vshrl.u32 %v286, 7
        %v288 = vsub.s32 1, %v287
        %v289 = vrot.slane %v253, %v288
        %v290 = vlaneseq
        %v291 = vshrl.u32 %v290, 7
        %v292 = vsub.s32 1, %v291
        %v293 = vrot.slane %v254, %v292
        %v294 = vmul.f32 %v285, %v289
        %v295 = vmul.f32 %v284, %v293
        %vm296 = vcmask 31744
        %v298 = vsel %vm296, %v245, 0
        %vm300 = vcmask 1043456
        %v302 = vsel %vm300, %v294, 0
        %v305 = vsel %vm300, %v295, 0
        %307 = vmatprep.subr.mxu0 %v305
        %308 = vmatpush1.msra.mxu0 %v302
        %309 = vmatprep.subr.mxu0 0.0
        %310 = vmatpush1.msra.mxu0 0.0
        %311 = vmatprep.subr.mxu0 0.0
        %312 = vmatpush1.msra.mxu0 0.0
        %313 = vmatprep.subr.mxu0 0.0
        %314 = vmatpush1.msra.mxu0 0.0
        %315 = vmatprep.subr.mxu0 0.0
        %316 = vmatpush1.msra.mxu0 0.0
        %317 = vmatprep.subr.mxu0 0.0
        %318 = vmatpush1.msra.mxu0 0.0
        %319 = vmatprep.subr.mxu0 0.0
        %320 = vmatpush1.msra.mxu0 0.0
        %321 = vmatprep.subr.mxu0 0.0
        %322 = vmatpush1.msra.mxu0 0.0
        %323 = vmatprep.subr.mxu0 0.0
        %324 = vmatpush1.msra.mxu0 0.0
        %325 = vmatprep.subr.mxu0 0.0
        %326 = vmatpush1.msra.mxu0 0.0
        %327 = vmatprep.subr.mxu0 0.0
        %328 = vmatpush1.msra.mxu0 0.0
        %329 = vmatprep.subr.mxu0 0.0
        %330 = vmatpush1.msra.mxu0 0.0
        %331 = vmatprep.subr.mxu0 0.0
        %332 = vmatpush1.msra.mxu0 0.0
        %333 = vmatprep.subr.mxu0 0.0
        %334 = vmatpush1.msra.mxu0 0.0
        %335 = vmatprep.subr.mxu0 0.0
        %336 = vmatpush1.msra.mxu0 0.0
        %337 = vmatprep.subr.mxu0 0.0
        %338 = vmatpush1.msra.mxu0 0.0
        %339 = vmatprep.subr.mxu0 0.0
        %340 = vmatpush1.msra.mxu0 0.0
        %341 = vmatprep.subr.mxu0 0.0
        %342 = vmatpush1.msra.mxu0 0.0
        %343 = vmatprep.subr.mxu0 0.0
        %344 = vmatpush1.msra.mxu0 0.0
        %345 = vmatprep.subr.mxu0 0.0
        %346 = vmatpush1.msra.mxu0 0.0
        %347 = vmatprep.subr.mxu0 0.0
        %348 = vmatpush1.msra.mxu0 0.0
        %349 = vmatprep.subr.mxu0 0.0
        %350 = vmatpush1.msra.mxu0 0.0
        %351 = vmatprep.subr.mxu0 0.0
        %352 = vmatpush1.msra.mxu0 0.0
        %353 = vmatprep.subr.mxu0 0.0
        %354 = vmatpush1.msra.mxu0 0.0
        %355 = vmatprep.subr.mxu0 0.0
        %356 = vmatpush1.msra.mxu0 0.0
        %357 = vmatprep.subr.mxu0 0.0
        %358 = vmatpush1.msra.mxu0 0.0
        %359 = vmatprep.subr.mxu0 0.0
        %360 = vmatpush1.msra.mxu0 0.0
        %361 = vmatprep.subr.mxu0 0.0
        %362 = vmatpush1.msra.mxu0 0.0
        %363 = vmatprep.subr.mxu0 0.0
        %364 = vmatpush1.msra.mxu0 0.0
        %365 = vmatprep.subr.mxu0 0.0
        %366 = vmatpush1.msra.mxu0 0.0
        %367 = vmatprep.subr.mxu0 0.0
        %368 = vmatpush1.msra.mxu0 0.0
        %369 = vmatprep.subr.mxu0 0.0
        %370 = vmatpush1.msra.mxu0 0.0
        %371 = vmatprep.mubr.f32.mxu0 0.0
        %372 = vmatmul.mubr.f32.gmra.mrb[0].mxu0 %v298
        %v373 = vpop.f32.mrb[0].mxu0
        %v374 = vadd.f32 0.0, %v373
        %v375 = vpop.f32.mrb[0].mxu0
        %v376 = vadd.f32 0.0, %v375
        %377 = vdwg.mxu0
        %v379 = vsel %vm296, %v244, 0
        %v382 = vsel %vm300, %v277, 0
        %v385 = vsel %vm300, %v278, 0
        %387 = vmatprep.subr.mxu0 %v385
        %388 = vmatpush1.msra.mxu0 %v382
        %389 = vmatprep.subr.mxu0 0.0
        %390 = vmatpush1.msra.mxu0 0.0
        %391 = vmatprep.subr.mxu0 0.0
        %392 = vmatpush1.msra.mxu0 0.0
        %393 = vmatprep.subr.mxu0 0.0
        %394 = vmatpush1.msra.mxu0 0.0
        %395 = vmatprep.subr.mxu0 0.0
        %396 = vmatpush1.msra.mxu0 0.0
        %397 = vmatprep.subr.mxu0 0.0
        %398 = vmatpush1.msra.mxu0 0.0
        %399 = vmatprep.subr.mxu0 0.0
        %400 = vmatpush1.msra.mxu0 0.0
        %401 = vmatprep.subr.mxu0 0.0
        %402 = vmatpush1.msra.mxu0 0.0
        %403 = vmatprep.subr.mxu0 0.0
        %404 = vmatpush1.msra.mxu0 0.0
        %405 = vmatprep.subr.mxu0 0.0
        %406 = vmatpush1.msra.mxu0 0.0
        %407 = vmatprep.subr.mxu0 0.0
        %408 = vmatpush1.msra.mxu0 0.0
        %409 = vmatprep.subr.mxu0 0.0
        %410 = vmatpush1.msra.mxu0 0.0
        %411 = vmatprep.subr.mxu0 0.0
        %412 = vmatpush1.msra.mxu0 0.0
        %413 = vmatprep.subr.mxu0 0.0
        %414 = vmatpush1.msra.mxu0 0.0
        %415 = vmatprep.subr.mxu0 0.0
        %416 = vmatpush1.msra.mxu0 0.0
        %417 = vmatprep.subr.mxu0 0.0
        %418 = vmatpush1.msra.mxu0 0.0
        %419 = vmatprep.subr.mxu0 0.0
        %420 = vmatpush1.msra.mxu0 0.0
        %421 = vmatprep.subr.mxu0 0.0
        %422 = vmatpush1.msra.mxu0 0.0
        %423 = vmatprep.subr.mxu0 0.0
        %424 = vmatpush1.msra.mxu0 0.0
        %425 = vmatprep.subr.mxu0 0.0
        %426 = vmatpush1.msra.mxu0 0.0
        %427 = vmatprep.subr.mxu0 0.0
        %428 = vmatpush1.msra.mxu0 0.0
        %429 = vmatprep.subr.mxu0 0.0
        %430 = vmatpush1.msra.mxu0 0.0
        %431 = vmatprep.subr.mxu0 0.0
        %432 = vmatpush1.msra.mxu0 0.0
        %433 = vmatprep.subr.mxu0 0.0
        %434 = vmatpush1.msra.mxu0 0.0
        %435 = vmatprep.subr.mxu0 0.0
        %436 = vmatpush1.msra.mxu0 0.0
        %437 = vmatprep.subr.mxu0 0.0
        %438 = vmatpush1.msra.mxu0 0.0
        %439 = vmatprep.subr.mxu0 0.0
        %440 = vmatpush1.msra.mxu0 0.0
        %441 = vmatprep.subr.mxu0 0.0
        %442 = vmatpush1.msra.mxu0 0.0
        %443 = vmatprep.subr.mxu0 0.0
        %444 = vmatpush1.msra.mxu0 0.0
        %445 = vmatprep.subr.mxu0 0.0
        %446 = vmatpush1.msra.mxu0 0.0
        %447 = vmatprep.subr.mxu0 0.0
        %448 = vmatpush1.msra.mxu0 0.0
        %449 = vmatprep.subr.mxu0 0.0
        %450 = vmatpush1.msra.mxu0 0.0
        %451 = vmatprep.mubr.f32.mxu0 0.0
        %452 = vmatmul.mubr.f32.gmra.mrb[0].mxu0 %v379
        %v453 = vpop.f32.mrb[0].mxu0
        %v454 = vadd.f32 %v374, %v453
        %v455 = vpop.f32.mrb[0].mxu0
        %v456 = vadd.f32 %v376, %v455
        %457 = vdwg.mxu0
        %458 = vrot.lane.b32.xlu0 %v243, 15
        %v459 = vpop.permute.xlu0 %458
        %460 = vrot.lane.b32.xlu0 %v258, 15
        %v461 = vpop.permute.xlu0 %460
        %vm462 = vcmp.lt.s32.totalorder %v265, 15
        %v463 = vsel %vm462, %v459, %v461
        %v464 = vsel %vm462, %v461, %v459
        %v465 = vlaneseq
        %v466 = vshrl.u32 %v465, 7
        %v467 = vsub.s32 2, %v466
        %v468 = vrot.slane %v253, %v467
        %v469 = vlaneseq
        %v470 = vshrl.u32 %v469, 7
        %v471 = vsub.s32 2, %v470
        %v472 = vrot.slane %v254, %v471
        %v473 = vmul.f32 %v464, %v468
        %v474 = vmul.f32 %v463, %v472
        %v476 = vsel %vm296, %v246, 0
        %v479 = vsel %vm300, %v473, 0
        %v482 = vsel %vm300, %v474, 0
        %484 = vmatprep.subr.mxu0 %v482
        %485 = vmatpush1.msra.mxu0 %v479
        %486 = vmatprep.subr.mxu0 0.0
        %487 = vmatpush1.msra.mxu0 0.0
        %488 = vmatprep.subr.mxu0 0.0
        %489 = vmatpush1.msra.mxu0 0.0
        %490 = vmatprep.subr.mxu0 0.0
        %491 = vmatpush1.msra.mxu0 0.0
        %492 = vmatprep.subr.mxu0 0.0
        %493 = vmatpush1.msra.mxu0 0.0
        %494 = vmatprep.subr.mxu0 0.0
        %495 = vmatpush1.msra.mxu0 0.0
        %496 = vmatprep.subr.mxu0 0.0
        %497 = vmatpush1.msra.mxu0 0.0
        %498 = vmatprep.subr.mxu0 0.0
        %499 = vmatpush1.msra.mxu0 0.0
        %500 = vmatprep.subr.mxu0 0.0
        %501 = vmatpush1.msra.mxu0 0.0
        %502 = vmatprep.subr.mxu0 0.0
        %503 = vmatpush1.msra.mxu0 0.0
        %504 = vmatprep.subr.mxu0 0.0
        %505 = vmatpush1.msra.mxu0 0.0
        %506 = vmatprep.subr.mxu0 0.0
        %507 = vmatpush1.msra.mxu0 0.0
        %508 = vmatprep.subr.mxu0 0.0
        %509 = vmatpush1.msra.mxu0 0.0
        %510 = vmatprep.subr.mxu0 0.0
        %511 = vmatpush1.msra.mxu0 0.0
        %512 = vmatprep.subr.mxu0 0.0
        %513 = vmatpush1.msra.mxu0 0.0
        %514 = vmatprep.subr.mxu0 0.0
        %515 = vmatpush1.msra.mxu0 0.0
        %516 = vmatprep.subr.mxu0 0.0
        %517 = vmatpush1.msra.mxu0 0.0
        %518 = vmatprep.subr.mxu0 0.0
        %519 = vmatpush1.msra.mxu0 0.0
        %520 = vmatprep.subr.mxu0 0.0
        %521 = vmatpush1.msra.mxu0 0.0
        %522 = vmatprep.subr.mxu0 0.0
        %523 = vmatpush1.msra.mxu0 0.0
        %524 = vmatprep.subr.mxu0 0.0
        %525 = vmatpush1.msra.mxu0 0.0
        %526 = vmatprep.subr.mxu0 0.0
        %527 = vmatpush1.msra.mxu0 0.0
        %528 = vmatprep.subr.mxu0 0.0
        %529 = vmatpush1.msra.mxu0 0.0
        %530 = vmatprep.subr.mxu0 0.0
        %531 = vmatpush1.msra.mxu0 0.0
        %532 = vmatprep.subr.mxu0 0.0
        %533 = vmatpush1.msra.mxu0 0.0
        %534 = vmatprep.subr.mxu0 0.0
        %535 = vmatpush1.msra.mxu0 0.0
        %536 = vmatprep.subr.mxu0 0.0
        %537 = vmatpush1.msra.mxu0 0.0
        %538 = vmatprep.subr.mxu0 0.0
        %539 = vmatpush1.msra.mxu0 0.0
        %540 = vmatprep.subr.mxu0 0.0
        %541 = vmatpush1.msra.mxu0 0.0
        %542 = vmatprep.subr.mxu0 0.0
        %543 = vmatpush1.msra.mxu0 0.0
        %544 = vmatprep.subr.mxu0 0.0
        %545 = vmatpush1.msra.mxu0 0.0
        %546 = vmatprep.subr.mxu0 0.0
        %547 = vmatpush1.msra.mxu0 0.0
        %548 = vmatprep.mubr.f32.mxu0 0.0
        %549 = vmatmul.mubr.f32.gmra.mrb[0].mxu0 %v476
        %v550 = vpop.f32.mrb[0].mxu0
        %v551 = vadd.f32 0.0, %v550
        %v552 = vpop.f32.mrb[0].mxu0
        %v553 = vadd.f32 0.0, %v552
        %554 = vdwg.mxu0
        %v555 = vadd.f32 %v454, %v551
        %v556 = vadd.f32 %v456, %v553
        %557 = vrot.lane.b32.xlu0 %v243, 1
        %v558 = vpop.permute.xlu0 %557
        %559 = vrot.lane.b32.xlu0 %v258, 1
        %v560 = vpop.permute.xlu0 %559
        %vm561 = vcmp.lt.s32.totalorder %v265, 1
        %v562 = vsel %vm561, %v558, %v560
        %v563 = vsel %vm561, %v560, %v558
        %v564 = vlaneseq
        %v565 = vshrl.u32 %v564, 7
        %v566 = vsub.s32 3, %v565
        %v567 = vrot.slane %v253, %v566
        %v568 = vlaneseq
        %v569 = vshrl.u32 %v568, 7
        %v570 = vsub.s32 3, %v569
        %v571 = vrot.slane %v254, %v570
        %v572 = vmul.f32 %v563, %v567
        %v573 = vmul.f32 %v562, %v571
        %v575 = vsel %vm296, %v247, 0
        %v578 = vsel %vm300, %v572, 0
        %v581 = vsel %vm300, %v573, 0
        %583 = vmatprep.subr.mxu0 %v581
        %584 = vmatpush1.msra.mxu0 %v578
        %585 = vmatprep.subr.mxu0 0.0
        %586 = vmatpush1.msra.mxu0 0.0
        %587 = vmatprep.subr.mxu0 0.0
        %588 = vmatpush1.msra.mxu0 0.0
        %589 = vmatprep.subr.mxu0 0.0
        %590 = vmatpush1.msra.mxu0 0.0
        %591 = vmatprep.subr.mxu0 0.0
        %592 = vmatpush1.msra.mxu0 0.0
        %593 = vmatprep.subr.mxu0 0.0
        %594 = vmatpush1.msra.mxu0 0.0
        %595 = vmatprep.subr.mxu0 0.0
        %596 = vmatpush1.msra.mxu0 0.0
        %597 = vmatprep.subr.mxu0 0.0
        %598 = vmatpush1.msra.mxu0 0.0
        %599 = vmatprep.subr.mxu0 0.0
        %600 = vmatpush1.msra.mxu0 0.0
        %601 = vmatprep.subr.mxu0 0.0
        %602 = vmatpush1.msra.mxu0 0.0
        %603 = vmatprep.subr.mxu0 0.0
        %604 = vmatpush1.msra.mxu0 0.0
        %605 = vmatprep.subr.mxu0 0.0
        %606 = vmatpush1.msra.mxu0 0.0
        %607 = vmatprep.subr.mxu0 0.0
        %608 = vmatpush1.msra.mxu0 0.0
        %609 = vmatprep.subr.mxu0 0.0
        %610 = vmatpush1.msra.mxu0 0.0
        %611 = vmatprep.subr.mxu0 0.0
        %612 = vmatpush1.msra.mxu0 0.0
        %613 = vmatprep.subr.mxu0 0.0
        %614 = vmatpush1.msra.mxu0 0.0
        %615 = vmatprep.subr.mxu0 0.0
        %616 = vmatpush1.msra.mxu0 0.0
        %617 = vmatprep.subr.mxu0 0.0
        %618 = vmatpush1.msra.mxu0 0.0
        %619 = vmatprep.subr.mxu0 0.0
        %620 = vmatpush1.msra.mxu0 0.0
        %621 = vmatprep.subr.mxu0 0.0
        %622 = vmatpush1.msra.mxu0 0.0
        %623 = vmatprep.subr.mxu0 0.0
        %624 = vmatpush1.msra.mxu0 0.0
        %625 = vmatprep.subr.mxu0 0.0
        %626 = vmatpush1.msra.mxu0 0.0
        %627 = vmatprep.subr.mxu0 0.0
        %628 = vmatpush1.msra.mxu0 0.0
        %629 = vmatprep.subr.mxu0 0.0
        %630 = vmatpush1.msra.mxu0 0.0
        %631 = vmatprep.subr.mxu0 0.0
        %632 = vmatpush1.msra.mxu0 0.0
        %633 = vmatprep.subr.mxu0 0.0
        %634 = vmatpush1.msra.mxu0 0.0
        %635 = vmatprep.subr.mxu0 0.0
        %636 = vmatpush1.msra.mxu0 0.0
        %637 = vmatprep.subr.mxu0 0.0
        %638 = vmatpush1.msra.mxu0 0.0
        %639 = vmatprep.subr.mxu0 0.0
        %640 = vmatpush1.msra.mxu0 0.0
        %641 = vmatprep.subr.mxu0 0.0
        %642 = vmatpush1.msra.mxu0 0.0
        %643 = vmatprep.subr.mxu0 0.0
        %644 = vmatpush1.msra.mxu0 0.0
        %645 = vmatprep.subr.mxu0 0.0
        %646 = vmatpush1.msra.mxu0 0.0
        %647 = vmatprep.mubr.f32.mxu0 0.0
        %648 = vmatmul.mubr.f32.gmra.mrb[0].mxu0 %v575
        %v649 = vpop.f32.mrb[0].mxu0
        %v650 = vadd.f32 0.0, %v649
        %v651 = vpop.f32.mrb[0].mxu0
        %v652 = vadd.f32 0.0, %v651
        %653 = vdwg.mxu0
        %v654 = vadd.f32 %v555, %v650
        %v655 = vadd.f32 %v556, %v652
        %v657 = vsel %vm296, %v248, 0
        %v659 = vsel %vm300, %v243, 0
        %v661 = vsel %vm300, %v258, 0
        %663 = vmatprep.subr.mxu0 %v661
        %664 = vmatpush1.msra.mxu0 %v659
        %665 = vmatprep.subr.mxu0 0.0
        %666 = vmatpush1.msra.mxu0 0.0
        %667 = vmatprep.subr.mxu0 0.0
        %668 = vmatpush1.msra.mxu0 0.0
        %669 = vmatprep.subr.mxu0 0.0
        %670 = vmatpush1.msra.mxu0 0.0
        %671 = vmatprep.subr.mxu0 0.0
        %672 = vmatpush1.msra.mxu0 0.0
        %673 = vmatprep.subr.mxu0 0.0
        %674 = vmatpush1.msra.mxu0 0.0
        %675 = vmatprep.subr.mxu0 0.0
        %676 = vmatpush1.msra.mxu0 0.0
        %677 = vmatprep.subr.mxu0 0.0
        %678 = vmatpush1.msra.mxu0 0.0
        %679 = vmatprep.subr.mxu0 0.0
        %680 = vmatpush1.msra.mxu0 0.0
        %681 = vmatprep.subr.mxu0 0.0
        %682 = vmatpush1.msra.mxu0 0.0
        %683 = vmatprep.subr.mxu0 0.0
        %684 = vmatpush1.msra.mxu0 0.0
        %685 = vmatprep.subr.mxu0 0.0
        %686 = vmatpush1.msra.mxu0 0.0
        %687 = vmatprep.subr.mxu0 0.0
        %688 = vmatpush1.msra.mxu0 0.0
        %689 = vmatprep.subr.mxu0 0.0
        %690 = vmatpush1.msra.mxu0 0.0
        %691 = vmatprep.subr.mxu0 0.0
        %692 = vmatpush1.msra.mxu0 0.0
        %693 = vmatprep.subr.mxu0 0.0
        %694 = vmatpush1.msra.mxu0 0.0
        %695 = vmatprep.subr.mxu0 0.0
        %696 = vmatpush1.msra.mxu0 0.0
        %697 = vmatprep.subr.mxu0 0.0
        %698 = vmatpush1.msra.mxu0 0.0
        %699 = vmatprep.subr.mxu0 0.0
        %700 = vmatpush1.msra.mxu0 0.0
        %701 = vmatprep.subr.mxu0 0.0
        %702 = vmatpush1.msra.mxu0 0.0
        %703 = vmatprep.subr.mxu0 0.0
        %704 = vmatpush1.msra.mxu0 0.0
        %705 = vmatprep.subr.mxu0 0.0
        %706 = vmatpush1.msra.mxu0 0.0
        %707 = vmatprep.subr.mxu0 0.0
        %708 = vmatpush1.msra.mxu0 0.0
        %709 = vmatprep.subr.mxu0 0.0
        %710 = vmatpush1.msra.mxu0 0.0
        %711 = vmatprep.subr.mxu0 0.0
        %712 = vmatpush1.msra.mxu0 0.0
        %713 = vmatprep.subr.mxu0 0.0
        %714 = vmatpush1.msra.mxu0 0.0
        %715 = vmatprep.subr.mxu0 0.0
        %716 = vmatpush1.msra.mxu0 0.0
        %717 = vmatprep.subr.mxu0 0.0
        %718 = vmatpush1.msra.mxu0 0.0
        %719 = vmatprep.subr.mxu0 0.0
        %720 = vmatpush1.msra.mxu0 0.0
        %721 = vmatprep.subr.mxu0 0.0
        %722 = vmatpush1.msra.mxu0 0.0
        %723 = vmatprep.subr.mxu0 0.0
        %724 = vmatpush1.msra.mxu0 0.0
        %725 = vmatprep.subr.mxu0 0.0
        %726 = vmatpush1.msra.mxu0 0.0
        %727 = vmatprep.mubr.f32.mxu0 0.0
        %728 = vmatmul.mubr.f32.gmra.mrb[0].mxu0 %v657
        %v729 = vpop.f32.mrb[0].mxu0
        %v730 = vadd.f32 0.0, %v729
        %v731 = vpop.f32.mrb[0].mxu0
        %v732 = vadd.f32 0.0, %v731
        %733 = vdwg.mxu0
        %v734 = vadd.f32 %v654, %v730
        %v735 = vadd.f32 %v655, %v732
        %736 = vrot.lane.b32.xlu0 %v243, 127
        %v737 = vpop.permute.xlu0 %736
        %738 = vrot.lane.b32.xlu0 %v258, 127
        %v739 = vpop.permute.xlu0 %738
        %vm740 = vcmp.lt.s32.totalorder %v265, 127
        %v741 = vsel %vm740, %v737, %v739
        %v742 = vsel %vm740, %v739, %v737
        %v743 = vlaneseq
        %v744 = vshrl.u32 %v743, 7
        %v745 = vsub.s32 5, %v744
        %v746 = vrot.slane %v253, %v745
        %v747 = vlaneseq
        %v748 = vshrl.u32 %v747, 7
        %v749 = vsub.s32 5, %v748
        %v750 = vrot.slane %v254, %v749
        %v751 = vmul.f32 %v741, %v746
        %v752 = vmul.f32 %v742, %v750
        %v754 = vsel %vm296, %v249, 0
        %v757 = vsel %vm300, %v751, 0
        %v760 = vsel %vm300, %v752, 0
        %762 = vmatprep.subr.mxu0 %v760
        %763 = vmatpush1.msra.mxu0 %v757
        %764 = vmatprep.subr.mxu0 0.0
        %765 = vmatpush1.msra.mxu0 0.0
        %766 = vmatprep.subr.mxu0 0.0
        %767 = vmatpush1.msra.mxu0 0.0
        %768 = vmatprep.subr.mxu0 0.0
        %769 = vmatpush1.msra.mxu0 0.0
        %770 = vmatprep.subr.mxu0 0.0
        %771 = vmatpush1.msra.mxu0 0.0
        %772 = vmatprep.subr.mxu0 0.0
        %773 = vmatpush1.msra.mxu0 0.0
        %774 = vmatprep.subr.mxu0 0.0
        %775 = vmatpush1.msra.mxu0 0.0
        %776 = vmatprep.subr.mxu0 0.0
        %777 = vmatpush1.msra.mxu0 0.0
        %778 = vmatprep.subr.mxu0 0.0
        %779 = vmatpush1.msra.mxu0 0.0
        %780 = vmatprep.subr.mxu0 0.0
        %781 = vmatpush1.msra.mxu0 0.0
        %782 = vmatprep.subr.mxu0 0.0
        %783 = vmatpush1.msra.mxu0 0.0
        %784 = vmatprep.subr.mxu0 0.0
        %785 = vmatpush1.msra.mxu0 0.0
        %786 = vmatprep.subr.mxu0 0.0
        %787 = vmatpush1.msra.mxu0 0.0
        %788 = vmatprep.subr.mxu0 0.0
        %789 = vmatpush1.msra.mxu0 0.0
        %790 = vmatprep.subr.mxu0 0.0
        %791 = vmatpush1.msra.mxu0 0.0
        %792 = vmatprep.subr.mxu0 0.0
        %793 = vmatpush1.msra.mxu0 0.0
        %794 = vmatprep.subr.mxu0 0.0
        %795 = vmatpush1.msra.mxu0 0.0
        %796 = vmatprep.subr.mxu0 0.0
        %797 = vmatpush1.msra.mxu0 0.0
        %798 = vmatprep.subr.mxu0 0.0
        %799 = vmatpush1.msra.mxu0 0.0
        %800 = vmatprep.subr.mxu0 0.0
        %801 = vmatpush1.msra.mxu0 0.0
        %802 = vmatprep.subr.mxu0 0.0
        %803 = vmatpush1.msra.mxu0 0.0
        %804 = vmatprep.subr.mxu0 0.0
        %805 = vmatpush1.msra.mxu0 0.0
        %806 = vmatprep.subr.mxu0 0.0
        %807 = vmatpush1.msra.mxu0 0.0
        %808 = vmatprep.subr.mxu0 0.0
        %809 = vmatpush1.msra.mxu0 0.0
        %810 = vmatprep.subr.mxu0 0.0
        %811 = vmatpush1.msra.mxu0 0.0
        %812 = vmatprep.subr.mxu0 0.0
        %813 = vmatpush1.msra.mxu0 0.0
        %814 = vmatprep.subr.mxu0 0.0
        %815 = vmatpush1.msra.mxu0 0.0
        %816 = vmatprep.subr.mxu0 0.0
        %817 = vmatpush1.msra.mxu0 0.0
        %818 = vmatprep.subr.mxu0 0.0
        %819 = vmatpush1.msra.mxu0 0.0
        %820 = vmatprep.subr.mxu0 0.0
        %821 = vmatpush1.msra.mxu0 0.0
        %822 = vmatprep.subr.mxu0 0.0
        %823 = vmatpush1.msra.mxu0 0.0
        %824 = vmatprep.subr.mxu0 0.0
        %825 = vmatpush1.msra.mxu0 0.0
        %826 = vmatprep.mubr.f32.mxu0 0.0
        %827 = vmatmul.mubr.f32.gmra.mrb[0].mxu0 %v754
        %v828 = vpop.f32.mrb[0].mxu0
        %v829 = vadd.f32 0.0, %v828
        %v830 = vpop.f32.mrb[0].mxu0
        %v831 = vadd.f32 0.0, %v830
        %832 = vdwg.mxu0
        %v833 = vadd.f32 %v734, %v829
        %v834 = vadd.f32 %v735, %v831
        %835 = vrot.lane.b32.xlu0 %v243, 113
        %v836 = vpop.permute.xlu0 %835
        %837 = vrot.lane.b32.xlu0 %v258, 113
        %v838 = vpop.permute.xlu0 %837
        %vm839 = vcmp.lt.s32.totalorder %v265, 113
        %v840 = vsel %vm839, %v836, %v838
        %v841 = vsel %vm839, %v838, %v836
        %v842 = vlaneseq
        %v843 = vshrl.u32 %v842, 7
        %v844 = vsub.s32 6, %v843
        %v845 = vrot.slane %v253, %v844
        %v846 = vlaneseq
        %v847 = vshrl.u32 %v846, 7
        %v848 = vsub.s32 6, %v847
        %v849 = vrot.slane %v254, %v848
        %v850 = vmul.f32 %v840, %v845
        %v851 = vmul.f32 %v841, %v849
        %v853 = vsel %vm296, %v250, 0
        %v856 = vsel %vm300, %v850, 0
        %v859 = vsel %vm300, %v851, 0
        %861 = vmatprep.subr.mxu0 %v859
        %862 = vmatpush1.msra.mxu0 %v856
        %863 = vmatprep.subr.mxu0 0.0
        %864 = vmatpush1.msra.mxu0 0.0
        %865 = vmatprep.subr.mxu0 0.0
        %866 = vmatpush1.msra.mxu0 0.0
        %867 = vmatprep.subr.mxu0 0.0
        %868 = vmatpush1.msra.mxu0 0.0
        %869 = vmatprep.subr.mxu0 0.0
        %870 = vmatpush1.msra.mxu0 0.0
        %871 = vmatprep.subr.mxu0 0.0
        %872 = vmatpush1.msra.mxu0 0.0
        %873 = vmatprep.subr.mxu0 0.0
        %874 = vmatpush1.msra.mxu0 0.0
        %875 = vmatprep.subr.mxu0 0.0
        %876 = vmatpush1.msra.mxu0 0.0
        %877 = vmatprep.subr.mxu0 0.0
        %878 = vmatpush1.msra.mxu0 0.0
        %879 = vmatprep.subr.mxu0 0.0
        %880 = vmatpush1.msra.mxu0 0.0
        %881 = vmatprep.subr.mxu0 0.0
        %882 = vmatpush1.msra.mxu0 0.0
        %883 = vmatprep.subr.mxu0 0.0
        %884 = vmatpush1.msra.mxu0 0.0
        %885 = vmatprep.subr.mxu0 0.0
        %886 = vmatpush1.msra.mxu0 0.0
        %887 = vmatprep.subr.mxu0 0.0
        %888 = vmatpush1.msra.mxu0 0.0
        %889 = vmatprep.subr.mxu0 0.0
        %890 = vmatpush1.msra.mxu0 0.0
        %891 = vmatprep.subr.mxu0 0.0
        %892 = vmatpush1.msra.mxu0 0.0
        %893 = vmatprep.subr.mxu0 0.0
        %894 = vmatpush1.msra.mxu0 0.0
        %895 = vmatprep.subr.mxu0 0.0
        %896 = vmatpush1.msra.mxu0 0.0
        %897 = vmatprep.subr.mxu0 0.0
        %898 = vmatpush1.msra.mxu0 0.0
        %899 = vmatprep.subr.mxu0 0.0
        %900 = vmatpush1.msra.mxu0 0.0
        %901 = vmatprep.subr.mxu0 0.0
        %902 = vmatpush1.msra.mxu0 0.0
        %903 = vmatprep.subr.mxu0 0.0
        %904 = vmatpush1.msra.mxu0 0.0
        %905 = vmatprep.subr.mxu0 0.0
        %906 = vmatpush1.msra.mxu0 0.0
        %907 = vmatprep.subr.mxu0 0.0
        %908 = vmatpush1.msra.mxu0 0.0
        %909 = vmatprep.subr.mxu0 0.0
        %910 = vmatpush1.msra.mxu0 0.0
        %911 = vmatprep.subr.mxu0 0.0
        %912 = vmatpush1.msra.mxu0 0.0
        %913 = vmatprep.subr.mxu0 0.0
        %914 = vmatpush1.msra.mxu0 0.0
        %915 = vmatprep.subr.mxu0 0.0
        %916 = vmatpush1.msra.mxu0 0.0
        %917 = vmatprep.subr.mxu0 0.0
        %918 = vmatpush1.msra.mxu0 0.0
        %919 = vmatprep.subr.mxu0 0.0
        %920 = vmatpush1.msra.mxu0 0.0
        %921 = vmatprep.subr.mxu0 0.0
        %922 = vmatpush1.msra.mxu0 0.0
        %923 = vmatprep.subr.mxu0 0.0
        %924 = vmatpush1.msra.mxu0 0.0
        %925 = vmatprep.mubr.f32.mxu0 0.0
        %926 = vmatmul.mubr.f32.gmra.mrb[0].mxu0 %v853
        %v927 = vpop.f32.mrb[0].mxu0
        %v928 = vadd.f32 0.0, %v927
        %v929 = vpop.f32.mrb[0].mxu0
        %v930 = vadd.f32 0.0, %v929
        %931 = vdwg.mxu0
        %v932 = vadd.f32 %v833, %v928
        %v933 = vadd.f32 %v834, %v930
        %934 = vrot.lane.b32.xlu0 %v243, 112
        %v935 = vpop.permute.xlu0 %934
        %936 = vrot.lane.b32.xlu0 %v258, 112
        %v937 = vpop.permute.xlu0 %936
        %vm938 = vcmp.lt.s32.totalorder %v265, 112
        %v939 = vsel %vm938, %v935, %v937
        %v940 = vsel %vm938, %v937, %v935
        %v941 = vlaneseq
        %v942 = vshrl.u32 %v941, 7
        %v943 = vsub.s32 7, %v942
        %v944 = vrot.slane %v253, %v943
        %v945 = vlaneseq
        %v946 = vshrl.u32 %v945, 7
        %v947 = vsub.s32 7, %v946
        %v948 = vrot.slane %v254, %v947
        %v949 = vmul.f32 %v939, %v944
        %v950 = vmul.f32 %v940, %v948
        %v952 = vsel %vm296, %v251, 0
        %v955 = vsel %vm300, %v949, 0
        %v958 = vsel %vm300, %v950, 0
        %960 = vmatprep.subr.mxu0 %v958
        %961 = vmatpush1.msra.mxu0 %v955
        %962 = vmatprep.subr.mxu0 0.0
        %963 = vmatpush1.msra.mxu0 0.0
        %964 = vmatprep.subr.mxu0 0.0
        %965 = vmatpush1.msra.mxu0 0.0
        %966 = vmatprep.subr.mxu0 0.0
        %967 = vmatpush1.msra.mxu0 0.0
        %968 = vmatprep.subr.mxu0 0.0
        %969 = vmatpush1.msra.mxu0 0.0
        %970 = vmatprep.subr.mxu0 0.0
        %971 = vmatpush1.msra.mxu0 0.0
        %972 = vmatprep.subr.mxu0 0.0
        %973 = vmatpush1.msra.mxu0 0.0
        %974 = vmatprep.subr.mxu0 0.0
        %975 = vmatpush1.msra.mxu0 0.0
        %976 = vmatprep.subr.mxu0 0.0
        %977 = vmatpush1.msra.mxu0 0.0
        %978 = vmatprep.subr.mxu0 0.0
        %979 = vmatpush1.msra.mxu0 0.0
        %980 = vmatprep.subr.mxu0 0.0
        %981 = vmatpush1.msra.mxu0 0.0
        %982 = vmatprep.subr.mxu0 0.0
        %983 = vmatpush1.msra.mxu0 0.0
        %984 = vmatprep.subr.mxu0 0.0
        %985 = vmatpush1.msra.mxu0 0.0
        %986 = vmatprep.subr.mxu0 0.0
        %987 = vmatpush1.msra.mxu0 0.0
        %988 = vmatprep.subr.mxu0 0.0
        %989 = vmatpush1.msra.mxu0 0.0
        %990 = vmatprep.subr.mxu0 0.0
        %991 = vmatpush1.msra.mxu0 0.0
        %992 = vmatprep.subr.mxu0 0.0
        %993 = vmatpush1.msra.mxu0 0.0
        %994 = vmatprep.subr.mxu0 0.0
        %995 = vmatpush1.msra.mxu0 0.0
        %996 = vmatprep.subr.mxu0 0.0
        %997 = vmatpush1.msra.mxu0 0.0
        %998 = vmatprep.subr.mxu0 0.0
        %999 = vmatpush1.msra.mxu0 0.0
        %1000 = vmatprep.subr.mxu0 0.0
        %1001 = vmatpush1.msra.mxu0 0.0
        %1002 = vmatprep.subr.mxu0 0.0
        %1003 = vmatpush1.msra.mxu0 0.0
        %1004 = vmatprep.subr.mxu0 0.0
        %1005 = vmatpush1.msra.mxu0 0.0
        %1006 = vmatprep.subr.mxu0 0.0
        %1007 = vmatpush1.msra.mxu0 0.0
        %1008 = vmatprep.subr.mxu0 0.0
        %1009 = vmatpush1.msra.mxu0 0.0
        %1010 = vmatprep.subr.mxu0 0.0
        %1011 = vmatpush1.msra.mxu0 0.0
        %1012 = vmatprep.subr.mxu0 0.0
        %1013 = vmatpush1.msra.mxu0 0.0
        %1014 = vmatprep.subr.mxu0 0.0
        %1015 = vmatpush1.msra.mxu0 0.0
        %1016 = vmatprep.subr.mxu0 0.0
        %1017 = vmatpush1.msra.mxu0 0.0
        %1018 = vmatprep.subr.mxu0 0.0
        %1019 = vmatpush1.msra.mxu0 0.0
        %1020 = vmatprep.subr.mxu0 0.0
        %1021 = vmatpush1.msra.mxu0 0.0
        %1022 = vmatprep.subr.mxu0 0.0
        %1023 = vmatpush1.msra.mxu0 0.0
        %1024 = vmatprep.mubr.f32.mxu0 0.0
        %1025 = vmatmul.mubr.f32.gmra.mrb[0].mxu0 %v952
        %v1026 = vpop.f32.mrb[0].mxu0
        %v1027 = vadd.f32 0.0, %v1026
        %v1028 = vpop.f32.mrb[0].mxu0
        %v1029 = vadd.f32 0.0, %v1028
        %1030 = vdwg.mxu0
        %v1031 = vadd.f32 %v932, %v1027
        %v1032 = vadd.f32 %v933, %v1029
        %1033 = vrot.lane.b32.xlu0 %v243, 111
        %v1034 = vpop.permute.xlu0 %1033
        %1035 = vrot.lane.b32.xlu0 %v258, 111
        %v1036 = vpop.permute.xlu0 %1035
        %vm1037 = vcmp.lt.s32.totalorder %v265, 111
        %v1038 = vsel %vm1037, %v1034, %v1036
        %v1039 = vsel %vm1037, %v1036, %v1034
        %v1040 = vlaneseq
        %v1041 = vshrl.u32 %v1040, 7
        %v1042 = vsub.s32 0, %v1041
        %v1043 = vrot.slane %v255, %v1042
        %v1044 = vlaneseq
        %v1045 = vshrl.u32 %v1044, 7
        %v1046 = vsub.s32 0, %v1045
        %v1047 = vrot.slane %v256, %v1046
        %v1048 = vmul.f32 %v1038, %v1043
        %v1049 = vmul.f32 %v1039, %v1047
        %v1051 = vsel %vm296, %v252, 0
        %v1054 = vsel %vm300, %v1048, 0
        %v1057 = vsel %vm300, %v1049, 0
        %1059 = vmatprep.subr.mxu0 %v1057
        %1060 = vmatpush1.msra.mxu0 %v1054
        %1061 = vmatprep.subr.mxu0 0.0
        %1062 = vmatpush1.msra.mxu0 0.0
        %1063 = vmatprep.subr.mxu0 0.0
        %1064 = vmatpush1.msra.mxu0 0.0
        %1065 = vmatprep.subr.mxu0 0.0
        %1066 = vmatpush1.msra.mxu0 0.0
        %1067 = vmatprep.subr.mxu0 0.0
        %1068 = vmatpush1.msra.mxu0 0.0
        %1069 = vmatprep.subr.mxu0 0.0
        %1070 = vmatpush1.msra.mxu0 0.0
        %1071 = vmatprep.subr.mxu0 0.0
        %1072 = vmatpush1.msra.mxu0 0.0
        %1073 = vmatprep.subr.mxu0 0.0
        %1074 = vmatpush1.msra.mxu0 0.0
        %1075 = vmatprep.subr.mxu0 0.0
        %1076 = vmatpush1.msra.mxu0 0.0
        %1077 = vmatprep.subr.mxu0 0.0
        %1078 = vmatpush1.msra.mxu0 0.0
        %1079 = vmatprep.subr.mxu0 0.0
        %1080 = vmatpush1.msra.mxu0 0.0
        %1081 = vmatprep.subr.mxu0 0.0
        %1082 = vmatpush1.msra.mxu0 0.0
        %1083 = vmatprep.subr.mxu0 0.0
        %1084 = vmatpush1.msra.mxu0 0.0
        %1085 = vmatprep.subr.mxu0 0.0
        %1086 = vmatpush1.msra.mxu0 0.0
        %1087 = vmatprep.subr.mxu0 0.0
        %1088 = vmatpush1.msra.mxu0 0.0
        %1089 = vmatprep.subr.mxu0 0.0
        %1090 = vmatpush1.msra.mxu0 0.0
        %1091 = vmatprep.subr.mxu0 0.0
        %1092 = vmatpush1.msra.mxu0 0.0
        %1093 = vmatprep.subr.mxu0 0.0
        %1094 = vmatpush1.msra.mxu0 0.0
        %1095 = vmatprep.subr.mxu0 0.0
        %1096 = vmatpush1.msra.mxu0 0.0
        %1097 = vmatprep.subr.mxu0 0.0
        %1098 = vmatpush1.msra.mxu0 0.0
        %1099 = vmatprep.subr.mxu0 0.0
        %1100 = vmatpush1.msra.mxu0 0.0
        %1101 = vmatprep.subr.mxu0 0.0
        %1102 = vmatpush1.msra.mxu0 0.0
        %1103 = vmatprep.subr.mxu0 0.0
        %1104 = vmatpush1.msra.mxu0 0.0
        %1105 = vmatprep.subr.mxu0 0.0
        %1106 = vmatpush1.msra.mxu0 0.0
        %1107 = vmatprep.subr.mxu0 0.0
        %1108 = vmatpush1.msra.mxu0 0.0
        %1109 = vmatprep.subr.mxu0 0.0
        %1110 = vmatpush1.msra.mxu0 0.0
        %1111 = vmatprep.subr.mxu0 0.0
        %1112 = vmatpush1.msra.mxu0 0.0
        %1113 = vmatprep.subr.mxu0 0.0
        %1114 = vmatpush1.msra.mxu0 0.0
        %1115 = vmatprep.subr.mxu0 0.0
        %1116 = vmatpush1.msra.mxu0 0.0
        %1117 = vmatprep.subr.mxu0 0.0
        %1118 = vmatpush1.msra.mxu0 0.0
        %1119 = vmatprep.subr.mxu0 0.0
        %1120 = vmatpush1.msra.mxu0 0.0
        %1121 = vmatprep.subr.mxu0 0.0
        %1122 = vmatpush1.msra.mxu0 0.0
        %1123 = vmatprep.mubr.f32.mxu0 0.0
        %1124 = vmatmul.mubr.f32.gmra.mrb[0].mxu0 %v1051
        %v1125 = vpop.f32.mrb[0].mxu0
        %v1126 = vadd.f32 0.0, %v1125
        %v1127 = vpop.f32.mrb[0].mxu0
        %v1128 = vadd.f32 0.0, %v1127
        %1129 = vdwg.mxu0
        %v1130 = vadd.f32 %v1031, %v1126
        %v1131 = vadd.f32 %v1032, %v1128
        %v1132 = vld [vmem:[%s3] sm:$0xff]
        %1134 = vset.pattern.permute.xlu0 0
        %1135 = vperm.xlu0 %1134, %v1132
        %v1136 = vpop.permute.xlu0 %1135
        %v1138 = vadd.f32 %v1130, %v1136
        %v1139 = vadd.f32 %v1131, %v1136
        %v1140 = vld [vmem:[%s237] sm:$0xff]
        %v1141 = vadd.f32 %v1138, 1.0
        %v1142 = vadd.f32 %v1139, 1.0
        %v1145 = vcombine.low %v1141, %v1142
        %v1147 = vmul.f32 %v1140, %v1145
        %v1150 = vcombine.high %v1138, %v1139
        %v1152 = vadd.f32 %v1147, %v1150
        %1153 = vst [vmem:[%s232] sm:$0xff] %v1152
        %s1154 = sand.u32 %s142, 1
        %s1155 = scalar_lea.sflag [#allocation3], %s1154
        %s1156 = sand.u32 %s142, 1
        %s1157 = smul.addr %s1156, 8
        %s1158 = scalar_lea.vmem [#allocation2], %s1157
        // Predicated region
        $region41: #{tpu_custom_call.1} parent=39 // pred_check
          %p1159 = pneg %p152
        $region42: #{tpu_custom_call.1} parent=39 // pred_check_branch
          %1161 = sbr.rel (%p1159) target = $region44
        $region43: #{tpu_custom_call.1} parent=39 // pred_region
          %s1163 = ssub.s32 128, 128
          %1164 = vsyncadd %s1155, %s1163
          %s1165 = smul.addr %s19, 2
          %s1166 = smul.addr %s1165, 64
          %s1167 = scalar_lea.hbm %s5, %s1166
          %s1169 = sshll.u32 %s1158, 4
          %s1170 = int_to_ptr.vmem [resolvable:$true] %s1169
          %1172 = dma.vmem_to_hbm [thread:$0]  %s1170, 128, %s1167, %s1155
        $region44: #{tpu_custom_call.1} parent=39 // pred_fallthru
          _
      $region40: #{tpu_custom_call.1} parent=5 // pred_fallthru
        _
      %p1173 = scmp.le.s32.totalorder 2, %s14
      // Predicated region
      $region45: #{tpu_custom_call.1} parent=5 // pred_check
        %p1174 = pneg %p1173
      $region46: #{tpu_custom_call.1} parent=5 // pred_check_branch
        %1176 = sbr.rel (%p1174) target = $region48
      $region47: #{tpu_custom_call.1} parent=5 // pred_region
        %s1177 = ssub.s32 %s14, 2
        // Predicated region
        $region49: #{tpu_custom_call.1} parent=47 // pred_check
          %p1178 = pneg %p158
        $region50: #{tpu_custom_call.1} parent=47 // pred_check_branch
          %1180 = sbr.rel (%p1178) target = $region52
        $region51: #{tpu_custom_call.1} parent=47 // pred_region
          %s1181 = sand.u32 %s143, 1
          %s1182 = scalar_lea.sflag [#allocation3], %s1181
          %s1183 = sand.u32 %s143, 1
          %s1184 = smul.addr %s1183, 8
          %s1185 = scalar_lea.vmem [#allocation2], %s1184
          %1186 = dma.done %s1182, 128
        $region52: #{tpu_custom_call.1} parent=47 // pred_fallthru
          _
      $region48: #{tpu_custom_call.1} parent=5 // pred_fallthru
        _
    $region6: #{tpu_custom_call.1} parent=1 // loop_footer
      %s18 = sadd.s32 1, %s14
    $region7: #{tpu_custom_call.1} parent=1 // loop_footer_branch
      %13 = sbr.rel target = $region3
    $region8: #{tpu_custom_call.1} parent=1 // loop_exit
      _
    %1187 = vsyncpa [#allocation3], 1
    %s1188 = scalar_lea.sflag [#allocation3], 1
    %1189 = vsyncpa %s1188, 1

</llo_original>
